<compile_context>
chip_gen: v6e
topology: v6e:2x2x1
jax: 0.10.0
libtpu: 0.0.40
codegen_flags: <defaults>
</compile_context>

<pallas_src>
import functools

import jax
import jax.numpy as jnp
from jax.experimental import pallas as pl
from jax.experimental.pallas import tpu as pltpu


# ----------------------------------------------------------------------------
# Fused kernel: encoder LSTM -> decoder LSTM -> Linear + ReLU * (-1)
# Gridless: invoked once, everything resident in VMEM (<100 KiB total).
# ----------------------------------------------------------------------------
def _solnn_kernel(enc_x_ref, dec_x_ref,
                  wih_e_ref, whh_e_ref, b_e_ref, wfc_e_ref, bfc_e_ref,
                  wih_d_ref, whh_d_ref, b_d_ref, wfc_d_ref, bfc_d_ref,
                  out_ref,
                  gx_e_scr, gx_d_scr, h_all_scr,
                  *, enc_len, dec_len, batch, hidden):
    f32 = jnp.float32
    B, H = batch, hidden

    # Lane mask selecting the 'g' gate (tanh); i/f/o use sigmoid.  Hoisted so
    # the broadcasted iota is built once (it is not CSE'd inside loops).
    lane = jax.lax.broadcasted_iota(jnp.int32, (B, 4 * H), 1)
    g_lane = (lane >= 2 * H) & (lane < 3 * H)

    # --- Hoisted input projections for BOTH stages (off the serial path) ----
    # One (T*B,F)@(F,4H) matmul per stage, bf16 operands, f32 accumulation.
    gx_e_scr[...] = (
        jnp.dot(enc_x_ref[...], wih_e_ref[...], preferred_element_type=f32)
        + b_e_ref[...])
    gx_d_scr[...] = (
        jnp.dot(dec_x_ref[...], wih_d_ref[...], preferred_element_type=f32)
        + b_d_ref[...])

    def run_stage(gx_scr, whh_ref, n_steps, h, c, row0):
        whh = whh_ref[...]                       # (H, 4H) bf16, stays resident

        # Short static trip count (<= 5) -> Python unroll: full scheduler
        # visibility, every slice offset static.  Only h @ W_hh^T sits on the
        # serial dependency chain.
        for t in range(n_steps):
            gates = (gx_scr[t * B:(t + 1) * B, :]
                     + jnp.dot(h.astype(whh.dtype), whh,
                               preferred_element_type=f32))
            # Full-vreg activations (one sigmoid + one tanh over all 4H lanes)
            # combined with the lane mask; then align per-gate slices.
            act = jnp.where(g_lane, jnp.tanh(gates), jax.nn.sigmoid(gates))
            i_g = act[:, 0 * H:1 * H]
            f_g = act[:, 1 * H:2 * H]
            g_g = act[:, 2 * H:3 * H]
            o_g = act[:, 3 * H:4 * H]
            c = f_g * c + i_g * g_g
            h = o_g * jnp.tanh(c)
            # stage h_t for the deferred output head
            h_all_scr[row0 + t * B:row0 + (t + 1) * B, :] = h
        return h, c

    h0 = jnp.zeros((B, H), f32)
    c0 = jnp.zeros((B, H), f32)
    # Encoder (zero initial state) -> decoder (carries encoder's final h/c
    # directly in registers; never written to HBM).
    h, c = run_stage(gx_e_scr, whh_e_ref, enc_len, h0, c0, 0)
    run_stage(gx_d_scr, whh_d_ref, dec_len, h, c, enc_len * B)

    # Deferred output head: relu(h @ W_fc^T + b_fc) * -1, batched over all
    # timesteps of each stage (two matmuls + two stores total).
    ne = enc_len * B
    h_enc = h_all_scr[:ne, :].astype(wfc_e_ref.dtype)
    h_dec = h_all_scr[ne:, :].astype(wfc_d_ref.dtype)
    enc_o = (jnp.dot(h_enc, wfc_e_ref[...], preferred_element_type=f32)
             + bfc_e_ref[...])
    dec_o = (jnp.dot(h_dec, wfc_d_ref[...], preferred_element_type=f32)
             + bfc_d_ref[...])
    out_ref[:ne, :] = (jnp.maximum(enc_o, 0.0) * -1.0).astype(out_ref.dtype)
    out_ref[ne:, :] = (jnp.maximum(dec_o, 0.0) * -1.0).astype(out_ref.dtype)


# ----------------------------------------------------------------------------
# Wrapper: column slicing, time-major flattening, weight prep, pallas_call
# ----------------------------------------------------------------------------
@functools.partial(jax.jit, static_argnums=2)
def solnn_forward(params, input_X, enco_len):
    """input_X: (B, T, F_total) f32, batch_first like PyTorch."""
    B, T_total, _ = input_X.shape
    Te = enco_len
    Td = T_total - enco_len
    pe, pd = params["enc"], params["dec"]
    H = pe["w_hh"].shape[1]
    O = pe["w_fc"].shape[0]
    bf16 = jnp.bfloat16

    # Column selection via contiguous static slices (no XLA gather):
    #   encoder cols [0..5, 8..11], decoder cols [1..5, 8..11].
    enc_x = jnp.concatenate(
        [input_X[:, :Te, 0:6], input_X[:, :Te, 8:12]], axis=2)   # (B, Te, 10)
    dec_x = jnp.concatenate(
        [input_X[:, Te:, 1:6], input_X[:, Te:, 8:12]], axis=2)   # (B, Td, 9)

    # Time-major, flattened to (T*B, F); row index = t*B + b.
    enc_xf = enc_x.transpose(1, 0, 2).reshape(Te * B, -1).astype(bf16)
    dec_xf = dec_x.transpose(1, 0, 2).reshape(Td * B, -1).astype(bf16)

    def prep(p):
        return (jnp.asarray(p["w_ih"], jnp.float32).T.astype(bf16),    # (F, 4H)
                jnp.asarray(p["w_hh"], jnp.float32).T.astype(bf16),    # (H, 4H)
                (jnp.asarray(p["b_ih"], jnp.float32)
                 + jnp.asarray(p["b_hh"], jnp.float32)).reshape(1, 4 * H),
                jnp.asarray(p["w_fc"], jnp.float32).T.astype(bf16),    # (H, O)
                jnp.asarray(p["b_fc"], jnp.float32).reshape(1, O))

    wih_e, whh_e, b_e, wfc_e, bfc_e = prep(pe)
    wih_d, whh_d, b_d, wfc_d, bfc_d = prep(pd)

    kernel = functools.partial(_solnn_kernel, enc_len=Te, dec_len=Td,
                               batch=B, hidden=H)
    vmem = pltpu.MemorySpace.VMEM
    out_flat = pl.pallas_call(
        kernel,
        out_shape=jax.ShapeDtypeStruct((T_total * B, O), jnp.float32),
        in_specs=[pl.BlockSpec(memory_space=vmem)] * 12,
        out_specs=pl.BlockSpec(memory_space=vmem),
        scratch_shapes=[
            pltpu.VMEM((Te * B, 4 * H), jnp.float32),       # encoder gates_x
            pltpu.VMEM((Td * B, 4 * H), jnp.float32),       # decoder gates_x
            pltpu.VMEM((T_total * B, H), jnp.float32),      # all h_t
        ],
    )(enc_xf, dec_xf,
      wih_e, whh_e, b_e, wfc_e, bfc_e,
      wih_d, whh_d, b_d, wfc_d, bfc_d)

    # rows are ordered (enc t=0..Te-1 then dec t=0..Td-1) x batch, which is
    # exactly the torch.cat((encoder_out, decoder_out), 1) layout.
    return out_flat.reshape(T_total, B, O).transpose(1, 0, 2)   # (B, T, O)


# ----------------------------------------------------------------------------
# Deterministic parameter init (PyTorch shapes / gate order i,f,g,o)
# ----------------------------------------------------------------------------
def init_solnn_params(key, enc_in, dec_in, hidden, out_size):
    def u(k, shape, scale):
        return jax.random.uniform(k, shape, jnp.float32, -scale, scale)

    s = 1.0 / jnp.sqrt(hidden)
    ks = jax.random.split(key, 12)
    return {
        "enc": {
            "w_ih": u(ks[0], (4 * hidden, enc_in), s),
            "w_hh": u(ks[1], (4 * hidden, hidden), s),
            "b_ih": u(ks[2], (4 * hidden,), s),
            "b_hh": u(ks[3], (4 * hidden,), s),
            "w_fc": u(ks[4], (out_size, hidden), s),
            "b_fc": u(ks[5], (out_size,), s),
        },
        "dec": {
            "w_ih": u(ks[6], (4 * hidden, dec_in), s),
            "w_hh": u(ks[7], (4 * hidden, hidden), s),
            "b_ih": u(ks[8], (4 * hidden,), s),
            "b_hh": u(ks[9], (4 * hidden,), s),
            "w_fc": u(ks[10], (out_size, hidden), s),
            "b_fc": u(ks[11], (out_size,), s),
        },
    }


# ----------------------------------------------------------------------------
# Pure-JAX f32 reference (lax.scan, PyTorch semantics) for verification
# ----------------------------------------------------------------------------
ENC_COLS = (0, 1, 2, 3, 4, 5, 8, 9, 10, 11)
DEC_COLS = (1, 2, 3, 4, 5, 8, 9, 10, 11)


def _lstm_fc_ref(x_tbf, p, h0, c0):
    H = p["w_hh"].shape[1]

    def step(carry, x):
        h, c = carry
        gates = x @ p["w_ih"].T + h @ p["w_hh"].T + p["b_ih"] + p["b_hh"]
        i = jax.nn.sigmoid(gates[:, 0:H])
        f = jax.nn.sigmoid(gates[:, H:2 * H])
        g = jnp.tanh(gates[:, 2 * H:3 * H])
        o = jax.nn.sigmoid(gates[:, 3 * H:4 * H])
        c_new = f * c + i * g
        h_new = o * jnp.tanh(c_new)
        out = jnp.maximum(h_new @ p["w_fc"].T + p["b_fc"], 0.0) * -1.0
        return (h_new, c_new), out

    (hT, cT), outs = jax.lax.scan(step, (h0, c0), x_tbf)
    return outs, hT, cT


def solnn_forward_ref(params, input_X, enco_len):
    B = input_X.shape[0]
    H = params["enc"]["w_hh"].shape[1]
    enc_x = jnp.transpose(input_X[:, :enco_len, :][:, :, list(ENC_COLS)], (1, 0, 2))
    dec_x = jnp.transpose(input_X[:, enco_len:, :][:, :, list(DEC_COLS)], (1, 0, 2))
    zeros = jnp.zeros((B, H), jnp.float32)
    eo, hT, cT = _lstm_fc_ref(enc_x, params["enc"], zeros, zeros)
    do, _, _ = _lstm_fc_ref(dec_x, params["dec"], hT, cT)
    return jnp.concatenate([jnp.transpose(eo, (1, 0, 2)),
                            jnp.transpose(do, (1, 0, 2))], axis=1)


if __name__ == "__main__":
    # para = {SolNN_encoder_insize: 10, SolNN_encoder_hidden: 32,
    #         SolNN_decoder_insize: 9,  SolNN_decoder_hidden: 32,
    #         SolNN_decoder_outsize: 4, encoLen: 5}
    B, T, F_TOTAL = 2, 8, 12
    HIDDEN, OUT_SIZE, ENCO_LEN = 32, 4, 5

    key = jax.random.PRNGKey(0)
    k_param, k_x = jax.random.split(key)
    params = init_solnn_params(k_param, enc_in=10, dec_in=9,
                               hidden=HIDDEN, out_size=OUT_SIZE)
    input_X = jax.random.normal(k_x, (B, T, F_TOTAL), jnp.float32)

    out = jax.block_until_ready(solnn_forward(params, input_X, ENCO_LEN))
    ref = jax.block_until_ready(solnn_forward_ref(params, input_X, ENCO_LEN))

    assert out.shape == (B, T, OUT_SIZE)
    # bf16 weights/inputs with f32 accumulation vs the pure-f32 reference:
    # allow a few bf16 ulps of drift through the 8-step recurrence.
    assert jnp.allclose(out, ref, atol=2e-2, rtol=2e-2), "mismatch vs reference"

    print("KERNEL_OK")
</pallas_src>

<mosaic_0001>
module attributes {stable_mosaic.version = 11 : i64} {
  func.func @_solnn_kernel(%arg0: memref<10x10xbf16, #tpu.memory_space<vmem>>, %arg1: memref<6x9xbf16, #tpu.memory_space<vmem>>, %arg2: memref<10x128xbf16, #tpu.memory_space<vmem>>, %arg3: memref<32x128xbf16, #tpu.memory_space<vmem>>, %arg4: memref<1x128xf32, #tpu.memory_space<vmem>>, %arg5: memref<32x4xbf16, #tpu.memory_space<vmem>>, %arg6: memref<1x4xf32, #tpu.memory_space<vmem>>, %arg7: memref<9x128xbf16, #tpu.memory_space<vmem>>, %arg8: memref<32x128xbf16, #tpu.memory_space<vmem>>, %arg9: memref<1x128xf32, #tpu.memory_space<vmem>>, %arg10: memref<32x4xbf16, #tpu.memory_space<vmem>>, %arg11: memref<1x4xf32, #tpu.memory_space<vmem>>, %arg12: memref<16x4xf32, #tpu.memory_space<vmem>>, %arg13: memref<10x128xf32, #tpu.memory_space<vmem>>, %arg14: memref<6x128xf32, #tpu.memory_space<vmem>>, %arg15: memref<16x32xf32, #tpu.memory_space<vmem>>) attributes {dimension_semantics = [], scalar_prefetch = 0 : i64, scratch_operands = 3 : i64, tpu.core_type = #tpu.core_type<tc>} {
    %0 = tpu.iota {dimensions = array<i32: 1>} : vector<2x128xi32>
    %c64_i32 = arith.constant 64 : i32
    %1 = vector.broadcast %c64_i32 : i32 to vector<2x128xi32>
    %2 = arith.cmpi sge, %0, %1 : vector<2x128xi32>
    %c96_i32 = arith.constant 96 : i32
    %3 = vector.broadcast %c96_i32 : i32 to vector<2x128xi32>
    %4 = arith.cmpi slt, %0, %3 : vector<2x128xi32>
    %5 = arith.andi %2, %4 : vector<2x128xi1>
    %c0 = arith.constant 0 : index
    %c0_0 = arith.constant 0 : index
    %6 = vector.load %arg0[%c0, %c0_0] : memref<10x10xbf16, #tpu.memory_space<vmem>>, vector<10x10xbf16>
    %c0_1 = arith.constant 0 : index
    %c0_2 = arith.constant 0 : index
    %7 = vector.load %arg2[%c0_1, %c0_2] : memref<10x128xbf16, #tpu.memory_space<vmem>>, vector<10x128xbf16>
    %cst = arith.constant dense<0.000000e+00> : vector<10x128xf32>
    %8 = tpu.matmul %6, %7, %cst {dimension_numbers = #tpu.dot_dimension_numbers<[1], [0], [0], [1], [0, 0, 1, 1], [], []>} : vector<10x10xbf16>, vector<10x128xbf16>, vector<10x128xf32> -> vector<10x128xf32>
    %c0_3 = arith.constant 0 : index
    %c0_4 = arith.constant 0 : index
    %9 = vector.load %arg4[%c0_3, %c0_4] : memref<1x128xf32, #tpu.memory_space<vmem>>, vector<1x128xf32>
    %10 = vector.broadcast %9 : vector<1x128xf32> to vector<10x128xf32>
    %11 = arith.addf %8, %10 : vector<10x128xf32>
    %c0_5 = arith.constant 0 : index
    %c0_6 = arith.constant 0 : index
    %12 = vector.load %arg13[%c0_5, %c0_6] : memref<10x128xf32, #tpu.memory_space<vmem>>, vector<10x128xf32>
    tpu.vector_store %arg13[%c0_5, %c0_6], %11 {strides = array<i32>} : memref<10x128xf32, #tpu.memory_space<vmem>>, vector<10x128xf32>,
    %c0_7 = arith.constant 0 : index
    %c0_8 = arith.constant 0 : index
    %13 = vector.load %arg1[%c0_7, %c0_8] : memref<6x9xbf16, #tpu.memory_space<vmem>>, vector<6x9xbf16>
    %c0_9 = arith.constant 0 : index
    %c0_10 = arith.constant 0 : index
    %14 = vector.load %arg7[%c0_9, %c0_10] : memref<9x128xbf16, #tpu.memory_space<vmem>>, vector<9x128xbf16>
    %cst_11 = arith.constant dense<0.000000e+00> : vector<6x128xf32>
    %15 = tpu.matmul %13, %14, %cst_11 {dimension_numbers = #tpu.dot_dimension_numbers<[1], [0], [0], [1], [0, 0, 1, 1], [], []>} : vector<6x9xbf16>, vector<9x128xbf16>, vector<6x128xf32> -> vector<6x128xf32>
    %c0_12 = arith.constant 0 : index
    %c0_13 = arith.constant 0 : index
    %16 = vector.load %arg9[%c0_12, %c0_13] : memref<1x128xf32, #tpu.memory_space<vmem>>, vector<1x128xf32>
    %17 = vector.broadcast %16 : vector<1x128xf32> to vector<6x128xf32>
    %18 = arith.addf %15, %17 : vector<6x128xf32>
    %c0_14 = arith.constant 0 : index
    %c0_15 = arith.constant 0 : index
    %19 = vector.load %arg14[%c0_14, %c0_15] : memref<6x128xf32, #tpu.memory_space<vmem>>, vector<6x128xf32>
    tpu.vector_store %arg14[%c0_14, %c0_15], %18 {strides = array<i32>} : memref<6x128xf32, #tpu.memory_space<vmem>>, vector<6x128xf32>,
    %cst_16 = arith.constant 0.000000e+00 : f32
    %20 = vector.broadcast %cst_16 : f32 to vector<2x32xf32>
    %cst_17 = arith.constant 0.000000e+00 : f32
    %21 = vector.broadcast %cst_17 : f32 to vector<2x32xf32>
    %c0_18 = arith.constant 0 : index
    %c0_19 = arith.constant 0 : index
    %22 = vector.load %arg3[%c0_18, %c0_19] : memref<32x128xbf16, #tpu.memory_space<vmem>>, vector<32x128xbf16>
    %c0_20 = arith.constant 0 : index
    %c0_21 = arith.constant 0 : index
    %23 = vector.load %arg13[%c0_20, %c0_21] : memref<10x128xf32, #tpu.memory_space<vmem>>, vector<2x128xf32>
    %24 = arith.truncf %20 : vector<2x32xf32> to vector<2x32xbf16>
    %cst_22 = arith.constant dense<0.000000e+00> : vector<2x128xf32>
    %25 = tpu.matmul %24, %22, %cst_22 {dimension_numbers = #tpu.dot_dimension_numbers<[1], [0], [0], [1], [0, 0, 1, 1], [], []>} : vector<2x32xbf16>, vector<32x128xbf16>, vector<2x128xf32> -> vector<2x128xf32>
    %26 = arith.addf %23, %25 : vector<2x128xf32>
    %27 = math.tanh %26 : vector<2x128xf32>
    %28 = arith.negf %26 : vector<2x128xf32>
    %29 = math.exp %28 : vector<2x128xf32>
    %cst_23 = arith.constant 1.000000e+00 : f32
    %30 = vector.broadcast %cst_23 : f32 to vector<2x128xf32>
    %31 = arith.addf %30, %29 : vector<2x128xf32>
    %32 = arith.divf %30, %31 : vector<2x128xf32>
    %33 = arith.select %5, %27, %32 : vector<2x128xi1>, vector<2x128xf32>
    %34 = vector.extract_strided_slice %33 {offsets = [0, 0], sizes = [2, 32], strides = [1, 1]} : vector<2x128xf32> to vector<2x32xf32>
    %35 = vector.extract_strided_slice %33 {offsets = [0, 32], sizes = [2, 32], strides = [1, 1]} : vector<2x128xf32> to vector<2x32xf32>
    %36 = vector.extract_strided_slice %33 {offsets = [0, 64], sizes = [2, 32], strides = [1, 1]} : vector<2x128xf32> to vector<2x32xf32>
    %37 = vector.extract_strided_slice %33 {offsets = [0, 96], sizes = [2, 32], strides = [1, 1]} : vector<2x128xf32> to vector<2x32xf32>
    %38 = arith.mulf %35, %21 : vector<2x32xf32>
    %39 = arith.mulf %34, %36 : vector<2x32xf32>
    %40 = arith.addf %38, %39 : vector<2x32xf32>
    %41 = math.tanh %40 : vector<2x32xf32>
    %42 = arith.mulf %37, %41 : vector<2x32xf32>
    %c0_24 = arith.constant 0 : index
    %c0_25 = arith.constant 0 : index
    %43 = vector.load %arg15[%c0_24, %c0_25] : memref<16x32xf32, #tpu.memory_space<vmem>>, vector<2x32xf32>
    tpu.vector_store %arg15[%c0_24, %c0_25], %42 {strides = array<i32>} : memref<16x32xf32, #tpu.memory_space<vmem>>, vector<2x32xf32>,
    %c2 = arith.constant 2 : index
    %c0_26 = arith.constant 0 : index
    %44 = vector.load %arg13[%c2, %c0_26] : memref<10x128xf32, #tpu.memory_space<vmem>>, vector<2x128xf32>
    %45 = arith.truncf %42 : vector<2x32xf32> to vector<2x32xbf16>
    %cst_27 = arith.constant dense<0.000000e+00> : vector<2x128xf32>
    %46 = tpu.matmul %45, %22, %cst_27 {dimension_numbers = #tpu.dot_dimension_numbers<[1], [0], [0], [1], [0, 0, 1, 1], [], []>} : vector<2x32xbf16>, vector<32x128xbf16>, vector<2x128xf32> -> vector<2x128xf32>
    %47 = arith.addf %44, %46 : vector<2x128xf32>
    %48 = math.tanh %47 : vector<2x128xf32>
    %49 = arith.negf %47 : vector<2x128xf32>
    %50 = math.exp %49 : vector<2x128xf32>
    %cst_28 = arith.constant 1.000000e+00 : f32
    %51 = vector.broadcast %cst_28 : f32 to vector<2x128xf32>
    %52 = arith.addf %51, %50 : vector<2x128xf32>
    %53 = arith.divf %51, %52 : vector<2x128xf32>
    %54 = arith.select %5, %48, %53 : vector<2x128xi1>, vector<2x128xf32>
    %55 = vector.extract_strided_slice %54 {offsets = [0, 0], sizes = [2, 32], strides = [1, 1]} : vector<2x128xf32> to vector<2x32xf32>
    %56 = vector.extract_strided_slice %54 {offsets = [0, 32], sizes = [2, 32], strides = [1, 1]} : vector<2x128xf32> to vector<2x32xf32>
    %57 = vector.extract_strided_slice %54 {offsets = [0, 64], sizes = [2, 32], strides = [1, 1]} : vector<2x128xf32> to vector<2x32xf32>
    %58 = vector.extract_strided_slice %54 {offsets = [0, 96], sizes = [2, 32], strides = [1, 1]} : vector<2x128xf32> to vector<2x32xf32>
    %59 = arith.mulf %56, %40 : vector<2x32xf32>
    %60 = arith.mulf %55, %57 : vector<2x32xf32>
    %61 = arith.addf %59, %60 : vector<2x32xf32>
    %62 = math.tanh %61 : vector<2x32xf32>
    %63 = arith.mulf %58, %62 : vector<2x32xf32>
    %c2_29 = arith.constant 2 : index
    %c0_30 = arith.constant 0 : index
    %64 = vector.load %arg15[%c2_29, %c0_30] : memref<16x32xf32, #tpu.memory_space<vmem>>, vector<2x32xf32>
    tpu.vector_store %arg15[%c2_29, %c0_30], %63 {strides = array<i32>} : memref<16x32xf32, #tpu.memory_space<vmem>>, vector<2x32xf32>,
    %c4 = arith.constant 4 : index
    %c0_31 = arith.constant 0 : index
    %65 = vector.load %arg13[%c4, %c0_31] : memref<10x128xf32, #tpu.memory_space<vmem>>, vector<2x128xf32>
    %66 = arith.truncf %63 : vector<2x32xf32> to vector<2x32xbf16>
    %cst_32 = arith.constant dense<0.000000e+00> : vector<2x128xf32>
    %67 = tpu.matmul %66, %22, %cst_32 {dimension_numbers = #tpu.dot_dimension_numbers<[1], [0], [0], [1], [0, 0, 1, 1], [], []>} : vector<2x32xbf16>, vector<32x128xbf16>, vector<2x128xf32> -> vector<2x128xf32>
    %68 = arith.addf %65, %67 : vector<2x128xf32>
    %69 = math.tanh %68 : vector<2x128xf32>
    %70 = arith.negf %68 : vector<2x128xf32>
    %71 = math.exp %70 : vector<2x128xf32>
    %cst_33 = arith.constant 1.000000e+00 : f32
    %72 = vector.broadcast %cst_33 : f32 to vector<2x128xf32>
    %73 = arith.addf %72, %71 : vector<2x128xf32>
    %74 = arith.divf %72, %73 : vector<2x128xf32>
    %75 = arith.select %5, %69, %74 : vector<2x128xi1>, vector<2x128xf32>
    %76 = vector.extract_strided_slice %75 {offsets = [0, 0], sizes = [2, 32], strides = [1, 1]} : vector<2x128xf32> to vector<2x32xf32>
    %77 = vector.extract_strided_slice %75 {offsets = [0, 32], sizes = [2, 32], strides = [1, 1]} : vector<2x128xf32> to vector<2x32xf32>
    %78 = vector.extract_strided_slice %75 {offsets = [0, 64], sizes = [2, 32], strides = [1, 1]} : vector<2x128xf32> to vector<2x32xf32>
    %79 = vector.extract_strided_slice %75 {offsets = [0, 96], sizes = [2, 32], strides = [1, 1]} : vector<2x128xf32> to vector<2x32xf32>
    %80 = arith.mulf %77, %61 : vector<2x32xf32>
    %81 = arith.mulf %76, %78 : vector<2x32xf32>
    %82 = arith.addf %80, %81 : vector<2x32xf32>
    %83 = math.tanh %82 : vector<2x32xf32>
    %84 = arith.mulf %79, %83 : vector<2x32xf32>
    %c4_34 = arith.constant 4 : index
    %c0_35 = arith.constant 0 : index
    %85 = vector.load %arg15[%c4_34, %c0_35] : memref<16x32xf32, #tpu.memory_space<vmem>>, vector<2x32xf32>
    tpu.vector_store %arg15[%c4_34, %c0_35], %84 {strides = array<i32>} : memref<16x32xf32, #tpu.memory_space<vmem>>, vector<2x32xf32>,
    %c6 = arith.constant 6 : index
    %c0_36 = arith.constant 0 : index
    %86 = vector.load %arg13[%c6, %c0_36] : memref<10x128xf32, #tpu.memory_space<vmem>>, vector<2x128xf32>
    %87 = arith.truncf %84 : vector<2x32xf32> to vector<2x32xbf16>
    %cst_37 = arith.constant dense<0.000000e+00> : vector<2x128xf32>
    %88 = tpu.matmul %87, %22, %cst_37 {dimension_numbers = #tpu.dot_dimension_numbers<[1], [0], [0], [1], [0, 0, 1, 1], [], []>} : vector<2x32xbf16>, vector<32x128xbf16>, vector<2x128xf32> -> vector<2x128xf32>
    %89 = arith.addf %86, %88 : vector<2x128xf32>
    %90 = math.tanh %89 : vector<2x128xf32>
    %91 = arith.negf %89 : vector<2x128xf32>
    %92 = math.exp %91 : vector<2x128xf32>
    %cst_38 = arith.constant 1.000000e+00 : f32
    %93 = vector.broadcast %cst_38 : f32 to vector<2x128xf32>
    %94 = arith.addf %93, %92 : vector<2x128xf32>
    %95 = arith.divf %93, %94 : vector<2x128xf32>
    %96 = arith.select %5, %90, %95 : vector<2x128xi1>, vector<2x128xf32>
    %97 = vector.extract_strided_slice %96 {offsets = [0, 0], sizes = [2, 32], strides = [1, 1]} : vector<2x128xf32> to vector<2x32xf32>
    %98 = vector.extract_strided_slice %96 {offsets = [0, 32], sizes = [2, 32], strides = [1, 1]} : vector<2x128xf32> to vector<2x32xf32>
    %99 = vector.extract_strided_slice %96 {offsets = [0, 64], sizes = [2, 32], strides = [1, 1]} : vector<2x128xf32> to vector<2x32xf32>
    %100 = vector.extract_strided_slice %96 {offsets = [0, 96], sizes = [2, 32], strides = [1, 1]} : vector<2x128xf32> to vector<2x32xf32>
    %101 = arith.mulf %98, %82 : vector<2x32xf32>
    %102 = arith.mulf %97, %99 : vector<2x32xf32>
    %103 = arith.addf %101, %102 : vector<2x32xf32>
    %104 = math.tanh %103 : vector<2x32xf32>
    %105 = arith.mulf %100, %104 : vector<2x32xf32>
    %c6_39 = arith.constant 6 : index
    %c0_40 = arith.constant 0 : index
    %106 = vector.load %arg15[%c6_39, %c0_40] : memref<16x32xf32, #tpu.memory_space<vmem>>, vector<2x32xf32>
    tpu.vector_store %arg15[%c6_39, %c0_40], %105 {strides = array<i32>} : memref<16x32xf32, #tpu.memory_space<vmem>>, vector<2x32xf32>,
    %c8 = arith.constant 8 : index
    %c0_41 = arith.constant 0 : index
    %107 = vector.load %arg13[%c8, %c0_41] : memref<10x128xf32, #tpu.memory_space<vmem>>, vector<2x128xf32>
    %108 = arith.truncf %105 : vector<2x32xf32> to vector<2x32xbf16>
    %cst_42 = arith.constant dense<0.000000e+00> : vector<2x128xf32>
    %109 = tpu.matmul %108, %22, %cst_42 {dimension_numbers = #tpu.dot_dimension_numbers<[1], [0], [0], [1], [0, 0, 1, 1], [], []>} : vector<2x32xbf16>, vector<32x128xbf16>, vector<2x128xf32> -> vector<2x128xf32>
    %110 = arith.addf %107, %109 : vector<2x128xf32>
    %111 = math.tanh %110 : vector<2x128xf32>
    %112 = arith.negf %110 : vector<2x128xf32>
    %113 = math.exp %112 : vector<2x128xf32>
    %cst_43 = arith.constant 1.000000e+00 : f32
    %114 = vector.broadcast %cst_43 : f32 to vector<2x128xf32>
    %115 = arith.addf %114, %113 : vector<2x128xf32>
    %116 = arith.divf %114, %115 : vector<2x128xf32>
    %117 = arith.select %5, %111, %116 : vector<2x128xi1>, vector<2x128xf32>
    %118 = vector.extract_strided_slice %117 {offsets = [0, 0], sizes = [2, 32], strides = [1, 1]} : vector<2x128xf32> to vector<2x32xf32>
    %119 = vector.extract_strided_slice %117 {offsets = [0, 32], sizes = [2, 32], strides = [1, 1]} : vector<2x128xf32> to vector<2x32xf32>
    %120 = vector.extract_strided_slice %117 {offsets = [0, 64], sizes = [2, 32], strides = [1, 1]} : vector<2x128xf32> to vector<2x32xf32>
    %121 = vector.extract_strided_slice %117 {offsets = [0, 96], sizes = [2, 32], strides = [1, 1]} : vector<2x128xf32> to vector<2x32xf32>
    %122 = arith.mulf %119, %103 : vector<2x32xf32>
    %123 = arith.mulf %118, %120 : vector<2x32xf32>
    %124 = arith.addf %122, %123 : vector<2x32xf32>
    %125 = math.tanh %124 : vector<2x32xf32>
    %126 = arith.mulf %121, %125 : vector<2x32xf32>
    %c8_44 = arith.constant 8 : index
    %c0_45 = arith.constant 0 : index
    %127 = vector.load %arg15[%c8_44, %c0_45] : memref<16x32xf32, #tpu.memory_space<vmem>>, vector<2x32xf32>
    tpu.vector_store %arg15[%c8_44, %c0_45], %126 {strides = array<i32>} : memref<16x32xf32, #tpu.memory_space<vmem>>, vector<2x32xf32>,
    %c0_46 = arith.constant 0 : index
    %c0_47 = arith.constant 0 : index
    %128 = vector.load %arg8[%c0_46, %c0_47] : memref<32x128xbf16, #tpu.memory_space<vmem>>, vector<32x128xbf16>
    %c0_48 = arith.constant 0 : index
    %c0_49 = arith.constant 0 : index
    %129 = vector.load %arg14[%c0_48, %c0_49] : memref<6x128xf32, #tpu.memory_space<vmem>>, vector<2x128xf32>
    %130 = arith.truncf %126 : vector<2x32xf32> to vector<2x32xbf16>
    %cst_50 = arith.constant dense<0.000000e+00> : vector<2x128xf32>
    %131 = tpu.matmul %130, %128, %cst_50 {dimension_numbers = #tpu.dot_dimension_numbers<[1], [0], [0], [1], [0, 0, 1, 1], [], []>} : vector<2x32xbf16>, vector<32x128xbf16>, vector<2x128xf32> -> vector<2x128xf32>
    %132 = arith.addf %129, %131 : vector<2x128xf32>
    %133 = math.tanh %132 : vector<2x128xf32>
    %134 = arith.negf %132 : vector<2x128xf32>
    %135 = math.exp %134 : vector<2x128xf32>
    %cst_51 = arith.constant 1.000000e+00 : f32
    %136 = vector.broadcast %cst_51 : f32 to vector<2x128xf32>
    %137 = arith.addf %136, %135 : vector<2x128xf32>
    %138 = arith.divf %136, %137 : vector<2x128xf32>
    %139 = arith.select %5, %133, %138 : vector<2x128xi1>, vector<2x128xf32>
    %140 = vector.extract_strided_slice %139 {offsets = [0, 0], sizes = [2, 32], strides = [1, 1]} : vector<2x128xf32> to vector<2x32xf32>
    %141 = vector.extract_strided_slice %139 {offsets = [0, 32], sizes = [2, 32], strides = [1, 1]} : vector<2x128xf32> to vector<2x32xf32>
    %142 = vector.extract_strided_slice %139 {offsets = [0, 64], sizes = [2, 32], strides = [1, 1]} : vector<2x128xf32> to vector<2x32xf32>
    %143 = vector.extract_strided_slice %139 {offsets = [0, 96], sizes = [2, 32], strides = [1, 1]} : vector<2x128xf32> to vector<2x32xf32>
    %144 = arith.mulf %141, %124 : vector<2x32xf32>
    %145 = arith.mulf %140, %142 : vector<2x32xf32>
    %146 = arith.addf %144, %145 : vector<2x32xf32>
    %147 = math.tanh %146 : vector<2x32xf32>
    %148 = arith.mulf %143, %147 : vector<2x32xf32>
    %c10 = arith.constant 10 : index
    %c0_52 = arith.constant 0 : index
    %149 = vector.load %arg15[%c10, %c0_52] : memref<16x32xf32, #tpu.memory_space<vmem>>, vector<2x32xf32>
    tpu.vector_store %arg15[%c10, %c0_52], %148 {strides = array<i32>} : memref<16x32xf32, #tpu.memory_space<vmem>>, vector<2x32xf32>,
    %c2_53 = arith.constant 2 : index
    %c0_54 = arith.constant 0 : index
    %150 = vector.load %arg14[%c2_53, %c0_54] : memref<6x128xf32, #tpu.memory_space<vmem>>, vector<2x128xf32>
    %151 = arith.truncf %148 : vector<2x32xf32> to vector<2x32xbf16>
    %cst_55 = arith.constant dense<0.000000e+00> : vector<2x128xf32>
    %152 = tpu.matmul %151, %128, %cst_55 {dimension_numbers = #tpu.dot_dimension_numbers<[1], [0], [0], [1], [0, 0, 1, 1], [], []>} : vector<2x32xbf16>, vector<32x128xbf16>, vector<2x128xf32> -> vector<2x128xf32>
    %153 = arith.addf %150, %152 : vector<2x128xf32>
    %154 = math.tanh %153 : vector<2x128xf32>
    %155 = arith.negf %153 : vector<2x128xf32>
    %156 = math.exp %155 : vector<2x128xf32>
    %cst_56 = arith.constant 1.000000e+00 : f32
    %157 = vector.broadcast %cst_56 : f32 to vector<2x128xf32>
    %158 = arith.addf %157, %156 : vector<2x128xf32>
    %159 = arith.divf %157, %158 : vector<2x128xf32>
    %160 = arith.select %5, %154, %159 : vector<2x128xi1>, vector<2x128xf32>
    %161 = vector.extract_strided_slice %160 {offsets = [0, 0], sizes = [2, 32], strides = [1, 1]} : vector<2x128xf32> to vector<2x32xf32>
    %162 = vector.extract_strided_slice %160 {offsets = [0, 32], sizes = [2, 32], strides = [1, 1]} : vector<2x128xf32> to vector<2x32xf32>
    %163 = vector.extract_strided_slice %160 {offsets = [0, 64], sizes = [2, 32], strides = [1, 1]} : vector<2x128xf32> to vector<2x32xf32>
    %164 = vector.extract_strided_slice %160 {offsets = [0, 96], sizes = [2, 32], strides = [1, 1]} : vector<2x128xf32> to vector<2x32xf32>
    %165 = arith.mulf %162, %146 : vector<2x32xf32>
    %166 = arith.mulf %161, %163 : vector<2x32xf32>
    %167 = arith.addf %165, %166 : vector<2x32xf32>
    %168 = math.tanh %167 : vector<2x32xf32>
    %169 = arith.mulf %164, %168 : vector<2x32xf32>
    %c12 = arith.constant 12 : index
    %c0_57 = arith.constant 0 : index
    %170 = vector.load %arg15[%c12, %c0_57] : memref<16x32xf32, #tpu.memory_space<vmem>>, vector<2x32xf32>
    tpu.vector_store %arg15[%c12, %c0_57], %169 {strides = array<i32>} : memref<16x32xf32, #tpu.memory_space<vmem>>, vector<2x32xf32>,
    %c4_58 = arith.constant 4 : index
    %c0_59 = arith.constant 0 : index
    %171 = vector.load %arg14[%c4_58, %c0_59] : memref<6x128xf32, #tpu.memory_space<vmem>>, vector<2x128xf32>
    %172 = arith.truncf %169 : vector<2x32xf32> to vector<2x32xbf16>
    %cst_60 = arith.constant dense<0.000000e+00> : vector<2x128xf32>
    %173 = tpu.matmul %172, %128, %cst_60 {dimension_numbers = #tpu.dot_dimension_numbers<[1], [0], [0], [1], [0, 0, 1, 1], [], []>} : vector<2x32xbf16>, vector<32x128xbf16>, vector<2x128xf32> -> vector<2x128xf32>
    %174 = arith.addf %171, %173 : vector<2x128xf32>
    %175 = math.tanh %174 : vector<2x128xf32>
    %176 = arith.negf %174 : vector<2x128xf32>
    %177 = math.exp %176 : vector<2x128xf32>
    %cst_61 = arith.constant 1.000000e+00 : f32
    %178 = vector.broadcast %cst_61 : f32 to vector<2x128xf32>
    %179 = arith.addf %178, %177 : vector<2x128xf32>
    %180 = arith.divf %178, %179 : vector<2x128xf32>
    %181 = arith.select %5, %175, %180 : vector<2x128xi1>, vector<2x128xf32>
    %182 = vector.extract_strided_slice %181 {offsets = [0, 0], sizes = [2, 32], strides = [1, 1]} : vector<2x128xf32> to vector<2x32xf32>
    %183 = vector.extract_strided_slice %181 {offsets = [0, 32], sizes = [2, 32], strides = [1, 1]} : vector<2x128xf32> to vector<2x32xf32>
    %184 = vector.extract_strided_slice %181 {offsets = [0, 64], sizes = [2, 32], strides = [1, 1]} : vector<2x128xf32> to vector<2x32xf32>
    %185 = vector.extract_strided_slice %181 {offsets = [0, 96], sizes = [2, 32], strides = [1, 1]} : vector<2x128xf32> to vector<2x32xf32>
    %186 = arith.mulf %183, %167 : vector<2x32xf32>
    %187 = arith.mulf %182, %184 : vector<2x32xf32>
    %188 = arith.addf %186, %187 : vector<2x32xf32>
    %189 = math.tanh %188 : vector<2x32xf32>
    %190 = arith.mulf %185, %189 : vector<2x32xf32>
    %c14 = arith.constant 14 : index
    %c0_62 = arith.constant 0 : index
    %191 = vector.load %arg15[%c14, %c0_62] : memref<16x32xf32, #tpu.memory_space<vmem>>, vector<2x32xf32>
    tpu.vector_store %arg15[%c14, %c0_62], %190 {strides = array<i32>} : memref<16x32xf32, #tpu.memory_space<vmem>>, vector<2x32xf32>,
    %c0_63 = arith.constant 0 : index
    %c0_64 = arith.constant 0 : index
    %192 = vector.load %arg15[%c0_63, %c0_64] : memref<16x32xf32, #tpu.memory_space<vmem>>, vector<10x32xf32>
    %193 = arith.truncf %192 : vector<10x32xf32> to vector<10x32xbf16>
    %c10_65 = arith.constant 10 : index
    %c0_66 = arith.constant 0 : index
    %194 = vector.load %arg15[%c10_65, %c0_66] : memref<16x32xf32, #tpu.memory_space<vmem>>, vector<6x32xf32>
    %195 = arith.truncf %194 : vector<6x32xf32> to vector<6x32xbf16>
    %c0_67 = arith.constant 0 : index
    %c0_68 = arith.constant 0 : index
    %196 = vector.load %arg5[%c0_67, %c0_68] : memref<32x4xbf16, #tpu.memory_space<vmem>>, vector<32x4xbf16>
    %cst_69 = arith.constant dense<0.000000e+00> : vector<10x4xf32>
    %197 = tpu.matmul %193, %196, %cst_69 {dimension_numbers = #tpu.dot_dimension_numbers<[1], [0], [0], [1], [0, 0, 1, 1], [], []>} : vector<10x32xbf16>, vector<32x4xbf16>, vector<10x4xf32> -> vector<10x4xf32>
    %c0_70 = arith.constant 0 : index
    %c0_71 = arith.constant 0 : index
    %198 = vector.load %arg6[%c0_70, %c0_71] : memref<1x4xf32, #tpu.memory_space<vmem>>, vector<1x4xf32>
    %199 = vector.broadcast %198 : vector<1x4xf32> to vector<10x4xf32>
    %200 = arith.addf %197, %199 : vector<10x4xf32>
    %c0_72 = arith.constant 0 : index
    %c0_73 = arith.constant 0 : index
    %201 = vector.load %arg10[%c0_72, %c0_73] : memref<32x4xbf16, #tpu.memory_space<vmem>>, vector<32x4xbf16>
    %cst_74 = arith.constant dense<0.000000e+00> : vector<6x4xf32>
    %202 = tpu.matmul %195, %201, %cst_74 {dimension_numbers = #tpu.dot_dimension_numbers<[1], [0], [0], [1], [0, 0, 1, 1], [], []>} : vector<6x32xbf16>, vector<32x4xbf16>, vector<6x4xf32> -> vector<6x4xf32>
    %c0_75 = arith.constant 0 : index
    %c0_76 = arith.constant 0 : index
    %203 = vector.load %arg11[%c0_75, %c0_76] : memref<1x4xf32, #tpu.memory_space<vmem>>, vector<1x4xf32>
    %204 = vector.broadcast %203 : vector<1x4xf32> to vector<6x4xf32>
    %205 = arith.addf %202, %204 : vector<6x4xf32>
    %cst_77 = arith.constant 0.000000e+00 : f32
    %206 = vector.broadcast %cst_77 : f32 to vector<10x4xf32>
    %207 = arith.maximumf %200, %206 : vector<10x4xf32>
    %cst_78 = arith.constant -1.000000e+00 : f32
    %208 = vector.broadcast %cst_78 : f32 to vector<10x4xf32>
    %209 = arith.mulf %207, %208 : vector<10x4xf32>
    %c0_79 = arith.constant 0 : index
    %c0_80 = arith.constant 0 : index
    %210 = vector.load %arg12[%c0_79, %c0_80] : memref<16x4xf32, #tpu.memory_space<vmem>>, vector<10x4xf32>
    tpu.vector_store %arg12[%c0_79, %c0_80], %209 {strides = array<i32>} : memref<16x4xf32, #tpu.memory_space<vmem>>, vector<10x4xf32>,
    %cst_81 = arith.constant 0.000000e+00 : f32
    %211 = vector.broadcast %cst_81 : f32 to vector<6x4xf32>
    %212 = arith.maximumf %205, %211 : vector<6x4xf32>
    %cst_82 = arith.constant -1.000000e+00 : f32
    %213 = vector.broadcast %cst_82 : f32 to vector<6x4xf32>
    %214 = arith.mulf %212, %213 : vector<6x4xf32>
    %c10_83 = arith.constant 10 : index
    %c0_84 = arith.constant 0 : index
    %215 = vector.load %arg12[%c10_83, %c0_84] : memref<16x4xf32, #tpu.memory_space<vmem>>, vector<6x4xf32>
    tpu.vector_store %arg12[%c10_83, %c0_84], %214 {strides = array<i32>} : memref<16x4xf32, #tpu.memory_space<vmem>>, vector<6x4xf32>,
    return
  }
}

</mosaic_0001>

<llo_original>
// kernel: solnn_forward.1
$region0: #{solnn_forward.1}
  #allocation0 [shape = 'u32[]', space=smem, size = 0x4, offset = 0x4, fixed_abs, tag = 'smem constant byte address 0x4 - core index']
  #allocation1 [shape = 'u32[144,128]{1,0:T(1,128)}', space=vmem, size = 0x12000, scoped, tag = 'internal scratch']
  #allocation2 [shape = 'f32[10,128]{1,0:T(8,128)}', space=vmem, size = 0x2000, scoped, tag = 'scratch operand']
  #allocation3 [shape = 'f32[6,128]{1,0:T(8,128)}', space=vmem, size = 0x1000, scoped, tag = 'scratch operand']
  #allocation4 [shape = 'f32[16,32]{1,0:T(8,128)}', space=vmem, size = 0x2000, scoped, tag = 'scratch operand']
  %s0 = inlined_call_operand.vmem [shape: bf16[10,10], index: 0, kind: input, shape index: {}]
  %s1 = inlined_call_operand.vmem [shape: bf16[6,9], index: 1, kind: input, shape index: {}]
  %s2 = inlined_call_operand.vmem [shape: bf16[10,128], index: 2, kind: input, shape index: {}]
  %s3 = inlined_call_operand.vmem [shape: bf16[32,128], index: 3, kind: input, shape index: {}]
  %s4 = inlined_call_operand.vmem [shape: f32[1,128], index: 4, kind: input, shape index: {}]
  %s5 = inlined_call_operand.vmem [shape: bf16[32,4], index: 5, kind: input, shape index: {}]
  %s6 = inlined_call_operand.vmem [shape: f32[1,4], index: 6, kind: input, shape index: {}]
  %s7 = inlined_call_operand.vmem [shape: bf16[9,128], index: 7, kind: input, shape index: {}]
  %s8 = inlined_call_operand.vmem [shape: bf16[32,128], index: 8, kind: input, shape index: {}]
  %s9 = inlined_call_operand.vmem [shape: f32[1,128], index: 9, kind: input, shape index: {}]
  %s10 = inlined_call_operand.vmem [shape: bf16[32,4], index: 10, kind: input, shape index: {}]
  %s11 = inlined_call_operand.vmem [shape: f32[1,4], index: 11, kind: input, shape index: {}]
  %s12 = inlined_call_operand.vmem [shape: f32[16,4], index: 12, kind: output, shape index: {}]
  %s13 = sld [smem:[#allocation0]]
  $region58: #{solnn_forward.1} parent=0
    _
  %s15 = ssub.s32 1, %s13
  %s16 = scalar_select 0, %s15, %s13
  // Predicated region
  $region2: #{solnn_forward.1} parent=0 // pred_check
    _
  $region3: #{solnn_forward.1} parent=0 // pred_check_branch
    %18 = sbr.rel (0) target = $region5
  $region4: #{solnn_forward.1} parent=0 // pred_region
    _
  $region5: #{solnn_forward.1} parent=0 // pred_fallthru
    _
  // Predicated region
  $region6: #{solnn_forward.1} parent=0 // pred_check
    _
  $region7: #{solnn_forward.1} parent=0 // pred_check_branch
    %20 = sbr.rel (0) target = $region9
  $region8: #{solnn_forward.1} parent=0 // pred_region
    _
  $region9: #{solnn_forward.1} parent=0 // pred_fallthru
    _
  // Predicated region
  $region10: #{solnn_forward.1} parent=0 // pred_check
    _
  $region11: #{solnn_forward.1} parent=0 // pred_check_branch
    %22 = sbr.rel (0) target = $region13
  $region12: #{solnn_forward.1} parent=0 // pred_region
    _
  $region13: #{solnn_forward.1} parent=0 // pred_fallthru
    _
  // Predicated region
  $region14: #{solnn_forward.1} parent=0 // pred_check
    _
  $region15: #{solnn_forward.1} parent=0 // pred_check_branch
    %24 = sbr.rel (0) target = $region17
  $region16: #{solnn_forward.1} parent=0 // pred_region
    _
  $region17: #{solnn_forward.1} parent=0 // pred_fallthru
    _
  // Predicated region
  $region18: #{solnn_forward.1} parent=0 // pred_check
    _
  $region19: #{solnn_forward.1} parent=0 // pred_check_branch
    %26 = sbr.rel (0) target = $region21
  $region20: #{solnn_forward.1} parent=0 // pred_region
    _
  $region21: #{solnn_forward.1} parent=0 // pred_fallthru
    _
  // Predicated region
  $region22: #{solnn_forward.1} parent=0 // pred_check
    _
  $region23: #{solnn_forward.1} parent=0 // pred_check_branch
    %28 = sbr.rel (0) target = $region25
  $region24: #{solnn_forward.1} parent=0 // pred_region
    _
  $region25: #{solnn_forward.1} parent=0 // pred_fallthru
    _
  // Predicated region
  $region26: #{solnn_forward.1} parent=0 // pred_check
    _
  $region27: #{solnn_forward.1} parent=0 // pred_check_branch
    %30 = sbr.rel (0) target = $region29
  $region28: #{solnn_forward.1} parent=0 // pred_region
    _
  $region29: #{solnn_forward.1} parent=0 // pred_fallthru
    _
  // Predicated region
  $region30: #{solnn_forward.1} parent=0 // pred_check
    _
  $region31: #{solnn_forward.1} parent=0 // pred_check_branch
    %32 = sbr.rel (0) target = $region33
  $region32: #{solnn_forward.1} parent=0 // pred_region
    _
  $region33: #{solnn_forward.1} parent=0 // pred_fallthru
    _
  // Predicated region
  $region34: #{solnn_forward.1} parent=0 // pred_check
    _
  $region35: #{solnn_forward.1} parent=0 // pred_check_branch
    %34 = sbr.rel (0) target = $region37
  $region36: #{solnn_forward.1} parent=0 // pred_region
    _
  $region37: #{solnn_forward.1} parent=0 // pred_fallthru
    _
  // Predicated region
  $region38: #{solnn_forward.1} parent=0 // pred_check
    _
  $region39: #{solnn_forward.1} parent=0 // pred_check_branch
    %36 = sbr.rel (0) target = $region41
  $region40: #{solnn_forward.1} parent=0 // pred_region
    _
  $region41: #{solnn_forward.1} parent=0 // pred_fallthru
    _
  // Predicated region
  $region42: #{solnn_forward.1} parent=0 // pred_check
    _
  $region43: #{solnn_forward.1} parent=0 // pred_check_branch
    %38 = sbr.rel (0) target = $region45
  $region44: #{solnn_forward.1} parent=0 // pred_region
    _
  $region45: #{solnn_forward.1} parent=0 // pred_fallthru
    _
  // Predicated region
  $region46: #{solnn_forward.1} parent=0 // pred_check
    _
  $region47: #{solnn_forward.1} parent=0 // pred_check_branch
    %40 = sbr.rel (0) target = $region49
  $region48: #{solnn_forward.1} parent=0 // pred_region
    _
  $region49: #{solnn_forward.1} parent=0 // pred_fallthru
    _
  %v42 = vlaneseq
  %v43 = vand.u32 %v42, 127
  %vm44 = vcmp.ge.s32.totalorder %v43, 64
  %vm45 = vcmp.lt.s32.totalorder %v43, 96
  %vm46 = vmand %vm44, %vm45
  %v47 = vld [vmem:[%s0] sm:$0xf]
  %v48 = vld [vmem:[%s0 + $0x4] sm:$0x1]
  %v49 = vld [vmem:[%s2] sm:$0xf]
  %v50 = vld [vmem:[%s2 + $0x4] sm:$0x1]
  %v51 = vld [vmem:[%s4] sm:$0x1]
  %v53 = vlaneseq
  %v54 = vshrl.u32 %v53, 7
  %v55 = vsub.s32 0, %v54
  %v56 = vrot.slane %v51, %v55
  %v60 = vunpack.c.l.b16 %v47
  %v61 = vunpack.c.l.b16 %v48
  %v62 = vpack.c.b16 %v61, %v60
  %v65 = vunpack.c.l.b16 %v49
  %v66 = vunpack.c.l.b16 %v50
  %v67 = vpack.c.b16 %v66, %v65
  %vm68 = vcmask 80896
  %v70 = vsel %vm68, %v62, 0
  %vm72 = vcmask 1044480
  %v74 = vsel %vm72, %v67, 0
  %76 = vmatprep.subr.bf16.mxu0 0
  %77 = vmatpush1.bf16.msra.mxu0 0
  %78 = vmatprep.subr.bf16.mxu0 0
  %79 = vmatpush1.bf16.msra.mxu0 0
  %80 = vmatprep.subr.bf16.mxu0 0
  %81 = vmatpush1.bf16.msra.mxu0 0
  %82 = vmatprep.subr.bf16.mxu0 0
  %83 = vmatpush1.bf16.msra.mxu0 0
  %84 = vmatprep.subr.bf16.mxu0 0
  %85 = vmatpush1.bf16.msra.mxu0 0
  %86 = vmatprep.subr.bf16.mxu0 0
  %87 = vmatpush1.bf16.msra.mxu0 0
  %88 = vmatprep.subr.bf16.mxu0 0
  %89 = vmatpush1.bf16.msra.mxu0 0
  %90 = vmatprep.subr.bf16.mxu0 0
  %91 = vmatpush1.bf16.msra.mxu0 %v74
  %92 = vmatprep.subr.bf16.mxu0 0
  %93 = vmatpush2.bf16.msra.mxu0 0
  %94 = vmatprep.subr.bf16.mxu0 0
  %95 = vmatpush2.bf16.msra.mxu0 0
  %96 = vmatprep.subr.bf16.mxu0 0
  %97 = vmatpush2.bf16.msra.mxu0 0
  %98 = vmatprep.subr.bf16.mxu0 0
  %99 = vmatpush2.bf16.msra.mxu0 0
  %100 = vmatprep.subr.bf16.mxu0 0
  %101 = vmatpush2.bf16.msra.mxu0 0
  %102 = vmatprep.subr.bf16.mxu0 0
  %103 = vmatpush2.bf16.msra.mxu0 0
  %104 = vmatprep.subr.bf16.mxu0 0
  %105 = vmatpush2.bf16.msra.mxu0 0
  %106 = vmatprep.subr.bf16.mxu0 0
  %107 = vmatpush2.bf16.msra.mxu0 0
  %108 = vmatprep.mubr.bf16.mxu0 0
  %109 = vmatmul.mubr.bf16.gmra.mxu0 %v70
  %v110 = vpop.f32.mrf.mxu0
  %v111 = vadd.f32 %v56, %v110
  %v112 = vpop.f32.mrf.mxu0
  %v113 = vpop.f32.mrf.mxu0
  %v114 = vadd.f32 %v56, %v113
  %v115 = vpop.f32.mrf.mxu0
  %116 = vdwg.mxu0
  %117 = vst [vmem:[#allocation2] sm:$0xff] %v111
  %118 = vst [vmem:[#allocation2 + $0x8] sm:$0x3] %v114
  %v119 = vld [vmem:[%s1] sm:$0x7]
  %v120 = vld [vmem:[%s7] sm:$0xf]
  %v121 = vld [vmem:[%s7 + $0x4] sm:$0x1]
  %v122 = vld [vmem:[%s9] sm:$0x1]
  %v124 = vlaneseq
  %v125 = vshrl.u32 %v124, 7
  %v126 = vsub.s32 0, %v125
  %v127 = vrot.slane %v122, %v126
  %v131 = vunpack.c.l.b16 %v120
  %v132 = vunpack.c.l.b16 %v121
  %v133 = vpack.c.b16 %v132, %v131
  %vm134 = vcmask 72704
  %v136 = vsel %vm134, %v119, 0
  %vm138 = vcmask 1043456
  %v139 = vsel %vm138, 4294967295, 65535
  %v140 = vsel %vm72, %v139, 0
  %v142 = vand.u32 %v133, %v140
  %144 = vmatprep.subr.bf16.mxu0 0
  %145 = vmatpush1.bf16.msra.mxu0 0
  %146 = vmatprep.subr.bf16.mxu0 0
  %147 = vmatpush1.bf16.msra.mxu0 0
  %148 = vmatprep.subr.bf16.mxu0 0
  %149 = vmatpush1.bf16.msra.mxu0 0
  %150 = vmatprep.subr.bf16.mxu0 0
  %151 = vmatpush1.bf16.msra.mxu0 0
  %152 = vmatprep.subr.bf16.mxu0 0
  %153 = vmatpush1.bf16.msra.mxu0 0
  %154 = vmatprep.subr.bf16.mxu0 0
  %155 = vmatpush1.bf16.msra.mxu0 0
  %156 = vmatprep.subr.bf16.mxu0 0
  %157 = vmatpush1.bf16.msra.mxu0 0
  %158 = vmatprep.subr.bf16.mxu0 0
  %159 = vmatpush1.bf16.msra.mxu0 %v142
  %160 = vmatprep.subr.bf16.mxu0 0
  %161 = vmatpush2.bf16.msra.mxu0 0
  %162 = vmatprep.subr.bf16.mxu0 0
  %163 = vmatpush2.bf16.msra.mxu0 0
  %164 = vmatprep.subr.bf16.mxu0 0
  %165 = vmatpush2.bf16.msra.mxu0 0
  %166 = vmatprep.subr.bf16.mxu0 0
  %167 = vmatpush2.bf16.msra.mxu0 0
  %168 = vmatprep.subr.bf16.mxu0 0
  %169 = vmatpush2.bf16.msra.mxu0 0
  %170 = vmatprep.subr.bf16.mxu0 0
  %171 = vmatpush2.bf16.msra.mxu0 0
  %172 = vmatprep.subr.bf16.mxu0 0
  %173 = vmatpush2.bf16.msra.mxu0 0
  %174 = vmatprep.subr.bf16.mxu0 0
  %175 = vmatpush2.bf16.msra.mxu0 0
  %176 = vmatprep.mubr.bf16.mxu0 0
  %177 = vmatmul.mubr.bf16.gmra.mxu0 %v136
  %v178 = vpop.f32.mrf.mxu0
  %v179 = vadd.f32 %v127, %v178
  %v180 = vpop.f32.mrf.mxu0
  %v181 = vpop.f32.mrf.mxu0
  %v182 = vpop.f32.mrf.mxu0
  %183 = vdwg.mxu0
  %184 = vst [vmem:[#allocation3] sm:$0x3f] %v179
  %v185 = vld [vmem:[%s3] sm:$0xf]
  %v186 = vld [vmem:[%s3 + $0x4] sm:$0xf]
  %v187 = vld [vmem:[%s3 + $0x8] sm:$0xf]
  %v188 = vld [vmem:[%s3 + $0xc] sm:$0xf]
  %v189 = vld [vmem:[#allocation2] sm:$0x3]
  %v194 = vunpack.c.l.b16 %v185
  %v195 = vunpack.c.l.b16 %v186
  %v196 = vunpack.c.l.b16 %v187
  %v197 = vunpack.c.l.b16 %v188
  %v198 = vpack.c.b16 %v195, %v194
  %v199 = vpack.c.b16 %v197, %v196
  %vm202 = vcmask 261120
  %v204 = vsel %vm202, 0, 0
  %206 = vmatprep.subr.bf16.mxu0 0
  %207 = vmatpush1.bf16.msra.mxu0 0
  %208 = vmatprep.subr.bf16.mxu0 0
  %209 = vmatpush1.bf16.msra.mxu0 0
  %210 = vmatprep.subr.bf16.mxu0 0
  %211 = vmatpush1.bf16.msra.mxu0 0
  %212 = vmatprep.subr.bf16.mxu0 0
  %213 = vmatpush1.bf16.msra.mxu0 0
  %214 = vmatprep.subr.bf16.mxu0 0
  %215 = vmatpush1.bf16.msra.mxu0 0
  %216 = vmatprep.subr.bf16.mxu0 0
  %217 = vmatpush1.bf16.msra.mxu0 0
  %218 = vmatprep.subr.bf16.mxu0 0
  %219 = vmatpush1.bf16.msra.mxu0 %v199
  %220 = vmatprep.subr.bf16.mxu0 0
  %221 = vmatpush1.bf16.msra.mxu0 %v198
  %222 = vmatprep.subr.bf16.mxu0 0
  %223 = vmatpush2.bf16.msra.mxu0 0
  %224 = vmatprep.subr.bf16.mxu0 0
  %225 = vmatpush2.bf16.msra.mxu0 0
  %226 = vmatprep.subr.bf16.mxu0 0
  %227 = vmatpush2.bf16.msra.mxu0 0
  %228 = vmatprep.subr.bf16.mxu0 0
  %229 = vmatpush2.bf16.msra.mxu0 0
  %230 = vmatprep.subr.bf16.mxu0 0
  %231 = vmatpush2.bf16.msra.mxu0 0
  %232 = vmatprep.subr.bf16.mxu0 0
  %233 = vmatpush2.bf16.msra.mxu0 0
  %234 = vmatprep.subr.bf16.mxu0 0
  %235 = vmatpush2.bf16.msra.mxu0 0
  %236 = vmatprep.subr.bf16.mxu0 0
  %237 = vmatpush2.bf16.msra.mxu0 0
  %238 = vmatprep.mubr.bf16.mxu0 0
  %239 = vmatmul.mubr.bf16.gmra.mxu0 %v204
  %v240 = vpop.f32.mrf.mxu0
  %v241 = vadd.f32 0.0, %v240
  %v242 = vpop.f32.mrf.mxu0
  %v243 = vpop.f32.mrf.mxu0
  %v244 = vpop.f32.mrf.mxu0
  %245 = vdwg.mxu0
  %v246 = vadd.f32 %v189, %v241
  %v247 = vtanh.pop %v246
  %v248 = vxor.u32 %v246, 2147483648
  %v249 = vmul.f32 %v248, 1.442695
  %v250 = vpow.pop %v249
  %v251 = vadd.f32 %v250, 1.0
  %v252 = vrcp.pop %v251
  %v253 = vmul.f32 1.0, %v252
  %v254 = vsel %vm46, %v247, %v253
  %v255 = vmul.f32 %v254, 0.0
  %257 = vrot.lane.b32.xlu0 %v254, 64
  %v258 = vpop.permute.xlu0 %257
  %v260 = vmul.f32 %v254, %v258
  %262 = vrot.lane.b32.xlu0 %v260, 32
  %v263 = vpop.permute.xlu0 %262
  %v265 = vadd.f32 %v255, %v263
  %v266 = vtanh.pop %v265
  %268 = vrot.lane.b32.xlu0 %v266, 64
  %v269 = vpop.permute.xlu0 %268
  %v271 = vmul.f32 %v254, %v269
  %273 = vrot.lane.b32.xlu0 %v271, 32
  %v274 = vpop.permute.xlu0 %273
  %vm276 = vcmask 254976
  %277 = vst.msk [vmem:[#allocation4] sm:$0x3] %vm276, %v274
  %v278 = vld [vmem:[#allocation2 + $0x2] sm:$0x3]
  %v279 = vpack.c.bf16 %v271, %v271
  %281 = vrot.lane.b32.xlu0 %v279, 32
  %v282 = vpop.permute.xlu0 %281
  %v284 = vsel %vm202, %v282, 0
  %286 = vmatprep.subr.bf16.mxu0 0
  %287 = vmatpush1.bf16.msra.mxu0 0
  %288 = vmatprep.subr.bf16.mxu0 0
  %289 = vmatpush1.bf16.msra.mxu0 0
  %290 = vmatprep.subr.bf16.mxu0 0
  %291 = vmatpush1.bf16.msra.mxu0 0
  %292 = vmatprep.subr.bf16.mxu0 0
  %293 = vmatpush1.bf16.msra.mxu0 0
  %294 = vmatprep.subr.bf16.mxu0 0
  %295 = vmatpush1.bf16.msra.mxu0 0
  %296 = vmatprep.subr.bf16.mxu0 0
  %297 = vmatpush1.bf16.msra.mxu0 0
  %298 = vmatprep.subr.bf16.mxu0 0
  %299 = vmatpush1.bf16.msra.mxu0 %v199
  %300 = vmatprep.subr.bf16.mxu0 0
  %301 = vmatpush1.bf16.msra.mxu0 %v198
  %302 = vmatprep.subr.bf16.mxu0 0
  %303 = vmatpush2.bf16.msra.mxu0 0
  %304 = vmatprep.subr.bf16.mxu0 0
  %305 = vmatpush2.bf16.msra.mxu0 0
  %306 = vmatprep.subr.bf16.mxu0 0
  %307 = vmatpush2.bf16.msra.mxu0 0
  %308 = vmatprep.subr.bf16.mxu0 0
  %309 = vmatpush2.bf16.msra.mxu0 0
  %310 = vmatprep.subr.bf16.mxu0 0
  %311 = vmatpush2.bf16.msra.mxu0 0
  %312 = vmatprep.subr.bf16.mxu0 0
  %313 = vmatpush2.bf16.msra.mxu0 0
  %314 = vmatprep.subr.bf16.mxu0 0
  %315 = vmatpush2.bf16.msra.mxu0 0
  %316 = vmatprep.subr.bf16.mxu0 0
  %317 = vmatpush2.bf16.msra.mxu0 0
  %318 = vmatprep.mubr.bf16.mxu0 0
  %319 = vmatmul.mubr.bf16.gmra.mxu0 %v284
  %v320 = vpop.f32.mrf.mxu0
  %v321 = vadd.f32 0.0, %v320
  %v322 = vpop.f32.mrf.mxu0
  %v323 = vpop.f32.mrf.mxu0
  %v324 = vpop.f32.mrf.mxu0
  %325 = vdwg.mxu0
  %v326 = vadd.f32 %v278, %v321
  %v327 = vtanh.pop %v326
  %v328 = vxor.u32 %v326, 2147483648
  %v329 = vmul.f32 %v328, 1.442695
  %v330 = vpow.pop %v329
  %v331 = vadd.f32 %v330, 1.0
  %v332 = vrcp.pop %v331
  %v333 = vmul.f32 1.0, %v332
  %v334 = vsel %vm46, %v327, %v333
  %v335 = vmul.f32 %v334, %v265
  %337 = vrot.lane.b32.xlu0 %v334, 64
  %v338 = vpop.permute.xlu0 %337
  %v340 = vmul.f32 %v334, %v338
  %342 = vrot.lane.b32.xlu0 %v340, 32
  %v343 = vpop.permute.xlu0 %342
  %v345 = vadd.f32 %v335, %v343
  %v346 = vtanh.pop %v345
  %348 = vrot.lane.b32.xlu0 %v346, 64
  %v349 = vpop.permute.xlu0 %348
  %v351 = vmul.f32 %v334, %v349
  %353 = vrot.lane.b32.xlu0 %v351, 32
  %v354 = vpop.permute.xlu0 %353
  %356 = vst.msk [vmem:[#allocation4 + $0x2] sm:$0x3] %vm276, %v354
  %v357 = vld [vmem:[#allocation2 + $0x4] sm:$0x3]
  %v358 = vpack.c.bf16 %v351, %v351
  %360 = vrot.lane.b32.xlu0 %v358, 32
  %v361 = vpop.permute.xlu0 %360
  %v363 = vsel %vm202, %v361, 0
  %365 = vmatprep.subr.bf16.mxu0 0
  %366 = vmatpush1.bf16.msra.mxu0 0
  %367 = vmatprep.subr.bf16.mxu0 0
  %368 = vmatpush1.bf16.msra.mxu0 0
  %369 = vmatprep.subr.bf16.mxu0 0
  %370 = vmatpush1.bf16.msra.mxu0 0
  %371 = vmatprep.subr.bf16.mxu0 0
  %372 = vmatpush1.bf16.msra.mxu0 0
  %373 = vmatprep.subr.bf16.mxu0 0
  %374 = vmatpush1.bf16.msra.mxu0 0
  %375 = vmatprep.subr.bf16.mxu0 0
  %376 = vmatpush1.bf16.msra.mxu0 0
  %377 = vmatprep.subr.bf16.mxu0 0
  %378 = vmatpush1.bf16.msra.mxu0 %v199
  %379 = vmatprep.subr.bf16.mxu0 0
  %380 = vmatpush1.bf16.msra.mxu0 %v198
  %381 = vmatprep.subr.bf16.mxu0 0
  %382 = vmatpush2.bf16.msra.mxu0 0
  %383 = vmatprep.subr.bf16.mxu0 0
  %384 = vmatpush2.bf16.msra.mxu0 0
  %385 = vmatprep.subr.bf16.mxu0 0
  %386 = vmatpush2.bf16.msra.mxu0 0
  %387 = vmatprep.subr.bf16.mxu0 0
  %388 = vmatpush2.bf16.msra.mxu0 0
  %389 = vmatprep.subr.bf16.mxu0 0
  %390 = vmatpush2.bf16.msra.mxu0 0
  %391 = vmatprep.subr.bf16.mxu0 0
  %392 = vmatpush2.bf16.msra.mxu0 0
  %393 = vmatprep.subr.bf16.mxu0 0
  %394 = vmatpush2.bf16.msra.mxu0 0
  %395 = vmatprep.subr.bf16.mxu0 0
  %396 = vmatpush2.bf16.msra.mxu0 0
  %397 = vmatprep.mubr.bf16.mxu0 0
  %398 = vmatmul.mubr.bf16.gmra.mxu0 %v363
  %v399 = vpop.f32.mrf.mxu0
  %v400 = vadd.f32 0.0, %v399
  %v401 = vpop.f32.mrf.mxu0
  %v402 = vpop.f32.mrf.mxu0
  %v403 = vpop.f32.mrf.mxu0
  %404 = vdwg.mxu0
  %v405 = vadd.f32 %v357, %v400
  %v406 = vtanh.pop %v405
  %v407 = vxor.u32 %v405, 2147483648
  %v408 = vmul.f32 %v407, 1.442695
  %v409 = vpow.pop %v408
  %v410 = vadd.f32 %v409, 1.0
  %v411 = vrcp.pop %v410
  %v412 = vmul.f32 1.0, %v411
  %v413 = vsel %vm46, %v406, %v412
  %v414 = vmul.f32 %v413, %v345
  %416 = vrot.lane.b32.xlu0 %v413, 64
  %v417 = vpop.permute.xlu0 %416
  %v419 = vmul.f32 %v413, %v417
  %421 = vrot.lane.b32.xlu0 %v419, 32
  %v422 = vpop.permute.xlu0 %421
  %v424 = vadd.f32 %v414, %v422
  %v425 = vtanh.pop %v424
  %427 = vrot.lane.b32.xlu0 %v425, 64
  %v428 = vpop.permute.xlu0 %427
  %v430 = vmul.f32 %v413, %v428
  %432 = vrot.lane.b32.xlu0 %v430, 32
  %v433 = vpop.permute.xlu0 %432
  %435 = vst.msk [vmem:[#allocation4 + $0x4] sm:$0x3] %vm276, %v433
  %v436 = vld [vmem:[#allocation2 + $0x6] sm:$0x3]
  %v437 = vpack.c.bf16 %v430, %v430
  %439 = vrot.lane.b32.xlu0 %v437, 32
  %v440 = vpop.permute.xlu0 %439
  %v442 = vsel %vm202, %v440, 0
  %444 = vmatprep.subr.bf16.mxu0 0
  %445 = vmatpush1.bf16.msra.mxu0 0
  %446 = vmatprep.subr.bf16.mxu0 0
  %447 = vmatpush1.bf16.msra.mxu0 0
  %448 = vmatprep.subr.bf16.mxu0 0
  %449 = vmatpush1.bf16.msra.mxu0 0
  %450 = vmatprep.subr.bf16.mxu0 0
  %451 = vmatpush1.bf16.msra.mxu0 0
  %452 = vmatprep.subr.bf16.mxu0 0
  %453 = vmatpush1.bf16.msra.mxu0 0
  %454 = vmatprep.subr.bf16.mxu0 0
  %455 = vmatpush1.bf16.msra.mxu0 0
  %456 = vmatprep.subr.bf16.mxu0 0
  %457 = vmatpush1.bf16.msra.mxu0 %v199
  %458 = vmatprep.subr.bf16.mxu0 0
  %459 = vmatpush1.bf16.msra.mxu0 %v198
  %460 = vmatprep.subr.bf16.mxu0 0
  %461 = vmatpush2.bf16.msra.mxu0 0
  %462 = vmatprep.subr.bf16.mxu0 0
  %463 = vmatpush2.bf16.msra.mxu0 0
  %464 = vmatprep.subr.bf16.mxu0 0
  %465 = vmatpush2.bf16.msra.mxu0 0
  %466 = vmatprep.subr.bf16.mxu0 0
  %467 = vmatpush2.bf16.msra.mxu0 0
  %468 = vmatprep.subr.bf16.mxu0 0
  %469 = vmatpush2.bf16.msra.mxu0 0
  %470 = vmatprep.subr.bf16.mxu0 0
  %471 = vmatpush2.bf16.msra.mxu0 0
  %472 = vmatprep.subr.bf16.mxu0 0
  %473 = vmatpush2.bf16.msra.mxu0 0
  %474 = vmatprep.subr.bf16.mxu0 0
  %475 = vmatpush2.bf16.msra.mxu0 0
  %476 = vmatprep.mubr.bf16.mxu0 0
  %477 = vmatmul.mubr.bf16.gmra.mxu0 %v442
  %v478 = vpop.f32.mrf.mxu0
  %v479 = vadd.f32 0.0, %v478
  %v480 = vpop.f32.mrf.mxu0
  %v481 = vpop.f32.mrf.mxu0
  %v482 = vpop.f32.mrf.mxu0
  %483 = vdwg.mxu0
  %v484 = vadd.f32 %v436, %v479
  %v485 = vtanh.pop %v484
  %v486 = vxor.u32 %v484, 2147483648
  %v487 = vmul.f32 %v486, 1.442695
  %v488 = vpow.pop %v487
  %v489 = vadd.f32 %v488, 1.0
  %v490 = vrcp.pop %v489
  %v491 = vmul.f32 1.0, %v490
  %v492 = vsel %vm46, %v485, %v491
  %v493 = vmul.f32 %v492, %v424
  %495 = vrot.lane.b32.xlu0 %v492, 64
  %v496 = vpop.permute.xlu0 %495
  %v498 = vmul.f32 %v492, %v496
  %500 = vrot.lane.b32.xlu0 %v498, 32
  %v501 = vpop.permute.xlu0 %500
  %v503 = vadd.f32 %v493, %v501
  %v504 = vtanh.pop %v503
  %506 = vrot.lane.b32.xlu0 %v504, 64
  %v507 = vpop.permute.xlu0 %506
  %v509 = vmul.f32 %v492, %v507
  %511 = vrot.lane.b32.xlu0 %v509, 32
  %v512 = vpop.permute.xlu0 %511
  %514 = vst.msk [vmem:[#allocation4 + $0x6] sm:$0x3] %vm276, %v512
  %v515 = vld [vmem:[#allocation2 + $0x8] sm:$0x3]
  %v516 = vpack.c.bf16 %v509, %v509
  %518 = vrot.lane.b32.xlu0 %v516, 32
  %v519 = vpop.permute.xlu0 %518
  %v521 = vsel %vm202, %v519, 0
  %523 = vmatprep.subr.bf16.mxu0 0
  %524 = vmatpush1.bf16.msra.mxu0 0
  %525 = vmatprep.subr.bf16.mxu0 0
  %526 = vmatpush1.bf16.msra.mxu0 0
  %527 = vmatprep.subr.bf16.mxu0 0
  %528 = vmatpush1.bf16.msra.mxu0 0
  %529 = vmatprep.subr.bf16.mxu0 0
  %530 = vmatpush1.bf16.msra.mxu0 0
  %531 = vmatprep.subr.bf16.mxu0 0
  %532 = vmatpush1.bf16.msra.mxu0 0
  %533 = vmatprep.subr.bf16.mxu0 0
  %534 = vmatpush1.bf16.msra.mxu0 0
  %535 = vmatprep.subr.bf16.mxu0 0
  %536 = vmatpush1.bf16.msra.mxu0 %v199
  %537 = vmatprep.subr.bf16.mxu0 0
  %538 = vmatpush1.bf16.msra.mxu0 %v198
  %539 = vmatprep.subr.bf16.mxu0 0
  %540 = vmatpush2.bf16.msra.mxu0 0
  %541 = vmatprep.subr.bf16.mxu0 0
  %542 = vmatpush2.bf16.msra.mxu0 0
  %543 = vmatprep.subr.bf16.mxu0 0
  %544 = vmatpush2.bf16.msra.mxu0 0
  %545 = vmatprep.subr.bf16.mxu0 0
  %546 = vmatpush2.bf16.msra.mxu0 0
  %547 = vmatprep.subr.bf16.mxu0 0
  %548 = vmatpush2.bf16.msra.mxu0 0
  %549 = vmatprep.subr.bf16.mxu0 0
  %550 = vmatpush2.bf16.msra.mxu0 0
  %551 = vmatprep.subr.bf16.mxu0 0
  %552 = vmatpush2.bf16.msra.mxu0 0
  %553 = vmatprep.subr.bf16.mxu0 0
  %554 = vmatpush2.bf16.msra.mxu0 0
  %555 = vmatprep.mubr.bf16.mxu0 0
  %556 = vmatmul.mubr.bf16.gmra.mxu0 %v521
  %v557 = vpop.f32.mrf.mxu0
  %v558 = vadd.f32 0.0, %v557
  %v559 = vpop.f32.mrf.mxu0
  %v560 = vpop.f32.mrf.mxu0
  %v561 = vpop.f32.mrf.mxu0
  %562 = vdwg.mxu0
  %v563 = vadd.f32 %v515, %v558
  %v564 = vtanh.pop %v563
  %v565 = vxor.u32 %v563, 2147483648
  %v566 = vmul.f32 %v565, 1.442695
  %v567 = vpow.pop %v566
  %v568 = vadd.f32 %v567, 1.0
  %v569 = vrcp.pop %v568
  %v570 = vmul.f32 1.0, %v569
  %v571 = vsel %vm46, %v564, %v570
  %v572 = vmul.f32 %v571, %v503
  %574 = vrot.lane.b32.xlu0 %v571, 64
  %v575 = vpop.permute.xlu0 %574
  %v577 = vmul.f32 %v571, %v575
  %579 = vrot.lane.b32.xlu0 %v577, 32
  %v580 = vpop.permute.xlu0 %579
  %v582 = vadd.f32 %v572, %v580
  %v583 = vtanh.pop %v582
  %585 = vrot.lane.b32.xlu0 %v583, 64
  %v586 = vpop.permute.xlu0 %585
  %v588 = vmul.f32 %v571, %v586
  %590 = vrot.lane.b32.xlu0 %v588, 32
  %v591 = vpop.permute.xlu0 %590
  %593 = vst.msk [vmem:[#allocation4 + $0x8] sm:$0x3] %vm276, %v591
  %v594 = vld [vmem:[%s8] sm:$0xf]
  %v595 = vld [vmem:[%s8 + $0x4] sm:$0xf]
  %v596 = vld [vmem:[%s8 + $0x8] sm:$0xf]
  %v597 = vld [vmem:[%s8 + $0xc] sm:$0xf]
  %v598 = vld [vmem:[#allocation3] sm:$0x3]
  %v599 = vpack.c.bf16 %v588, %v588
  %601 = vrot.lane.b32.xlu0 %v599, 32
  %v602 = vpop.permute.xlu0 %601
  %v607 = vunpack.c.l.b16 %v594
  %v608 = vunpack.c.l.b16 %v595
  %v609 = vunpack.c.l.b16 %v596
  %v610 = vunpack.c.l.b16 %v597
  %v611 = vpack.c.b16 %v608, %v607
  %v612 = vpack.c.b16 %v610, %v609
  %v616 = vsel %vm202, %v602, 0
  %618 = vmatprep.subr.bf16.mxu0 0
  %619 = vmatpush1.bf16.msra.mxu0 0
  %620 = vmatprep.subr.bf16.mxu0 0
  %621 = vmatpush1.bf16.msra.mxu0 0
  %622 = vmatprep.subr.bf16.mxu0 0
  %623 = vmatpush1.bf16.msra.mxu0 0
  %624 = vmatprep.subr.bf16.mxu0 0
  %625 = vmatpush1.bf16.msra.mxu0 0
  %626 = vmatprep.subr.bf16.mxu0 0
  %627 = vmatpush1.bf16.msra.mxu0 0
  %628 = vmatprep.subr.bf16.mxu0 0
  %629 = vmatpush1.bf16.msra.mxu0 0
  %630 = vmatprep.subr.bf16.mxu0 0
  %631 = vmatpush1.bf16.msra.mxu0 %v612
  %632 = vmatprep.subr.bf16.mxu0 0
  %633 = vmatpush1.bf16.msra.mxu0 %v611
  %634 = vmatprep.subr.bf16.mxu0 0
  %635 = vmatpush2.bf16.msra.mxu0 0
  %636 = vmatprep.subr.bf16.mxu0 0
  %637 = vmatpush2.bf16.msra.mxu0 0
  %638 = vmatprep.subr.bf16.mxu0 0
  %639 = vmatpush2.bf16.msra.mxu0 0
  %640 = vmatprep.subr.bf16.mxu0 0
  %641 = vmatpush2.bf16.msra.mxu0 0
  %642 = vmatprep.subr.bf16.mxu0 0
  %643 = vmatpush2.bf16.msra.mxu0 0
  %644 = vmatprep.subr.bf16.mxu0 0
  %645 = vmatpush2.bf16.msra.mxu0 0
  %646 = vmatprep.subr.bf16.mxu0 0
  %647 = vmatpush2.bf16.msra.mxu0 0
  %648 = vmatprep.subr.bf16.mxu0 0
  %649 = vmatpush2.bf16.msra.mxu0 0
  %650 = vmatprep.mubr.bf16.mxu0 0
  %651 = vmatmul.mubr.bf16.gmra.mxu0 %v616
  %v652 = vpop.f32.mrf.mxu0
  %v653 = vadd.f32 0.0, %v652
  %v654 = vpop.f32.mrf.mxu0
  %v655 = vpop.f32.mrf.mxu0
  %v656 = vpop.f32.mrf.mxu0
  %657 = vdwg.mxu0
  %v658 = vadd.f32 %v598, %v653
  %v659 = vtanh.pop %v658
  %v660 = vxor.u32 %v658, 2147483648
  %v661 = vmul.f32 %v660, 1.442695
  %v662 = vpow.pop %v661
  %v663 = vadd.f32 %v662, 1.0
  %v664 = vrcp.pop %v663
  %v665 = vmul.f32 1.0, %v664
  %v666 = vsel %vm46, %v659, %v665
  %v667 = vmul.f32 %v666, %v582
  %669 = vrot.lane.b32.xlu0 %v666, 64
  %v670 = vpop.permute.xlu0 %669
  %v672 = vmul.f32 %v666, %v670
  %674 = vrot.lane.b32.xlu0 %v672, 32
  %v675 = vpop.permute.xlu0 %674
  %v677 = vadd.f32 %v667, %v675
  %v678 = vtanh.pop %v677
  %680 = vrot.lane.b32.xlu0 %v678, 64
  %v681 = vpop.permute.xlu0 %680
  %v683 = vmul.f32 %v666, %v681
  %685 = vrot.lane.b32.xlu0 %v683, 32
  %v686 = vpop.permute.xlu0 %685
  %688 = vst.msk [vmem:[#allocation4 + $0xa] sm:$0x3] %vm276, %v686
  %v689 = vld [vmem:[#allocation3 + $0x2] sm:$0x3]
  %v690 = vpack.c.bf16 %v683, %v683
  %692 = vrot.lane.b32.xlu0 %v690, 32
  %v693 = vpop.permute.xlu0 %692
  %v695 = vsel %vm202, %v693, 0
  %697 = vmatprep.subr.bf16.mxu0 0
  %698 = vmatpush1.bf16.msra.mxu0 0
  %699 = vmatprep.subr.bf16.mxu0 0
  %700 = vmatpush1.bf16.msra.mxu0 0
  %701 = vmatprep.subr.bf16.mxu0 0
  %702 = vmatpush1.bf16.msra.mxu0 0
  %703 = vmatprep.subr.bf16.mxu0 0
  %704 = vmatpush1.bf16.msra.mxu0 0
  %705 = vmatprep.subr.bf16.mxu0 0
  %706 = vmatpush1.bf16.msra.mxu0 0
  %707 = vmatprep.subr.bf16.mxu0 0
  %708 = vmatpush1.bf16.msra.mxu0 0
  %709 = vmatprep.subr.bf16.mxu0 0
  %710 = vmatpush1.bf16.msra.mxu0 %v612
  %711 = vmatprep.subr.bf16.mxu0 0
  %712 = vmatpush1.bf16.msra.mxu0 %v611
  %713 = vmatprep.subr.bf16.mxu0 0
  %714 = vmatpush2.bf16.msra.mxu0 0
  %715 = vmatprep.subr.bf16.mxu0 0
  %716 = vmatpush2.bf16.msra.mxu0 0
  %717 = vmatprep.subr.bf16.mxu0 0
  %718 = vmatpush2.bf16.msra.mxu0 0
  %719 = vmatprep.subr.bf16.mxu0 0
  %720 = vmatpush2.bf16.msra.mxu0 0
  %721 = vmatprep.subr.bf16.mxu0 0
  %722 = vmatpush2.bf16.msra.mxu0 0
  %723 = vmatprep.subr.bf16.mxu0 0
  %724 = vmatpush2.bf16.msra.mxu0 0
  %725 = vmatprep.subr.bf16.mxu0 0
  %726 = vmatpush2.bf16.msra.mxu0 0
  %727 = vmatprep.subr.bf16.mxu0 0
  %728 = vmatpush2.bf16.msra.mxu0 0
  %729 = vmatprep.mubr.bf16.mxu0 0
  %730 = vmatmul.mubr.bf16.gmra.mxu0 %v695
  %v731 = vpop.f32.mrf.mxu0
  %v732 = vadd.f32 0.0, %v731
  %v733 = vpop.f32.mrf.mxu0
  %v734 = vpop.f32.mrf.mxu0
  %v735 = vpop.f32.mrf.mxu0
  %736 = vdwg.mxu0
  %v737 = vadd.f32 %v689, %v732
  %v738 = vtanh.pop %v737
  %v739 = vxor.u32 %v737, 2147483648
  %v740 = vmul.f32 %v739, 1.442695
  %v741 = vpow.pop %v740
  %v742 = vadd.f32 %v741, 1.0
  %v743 = vrcp.pop %v742
  %v744 = vmul.f32 1.0, %v743
  %v745 = vsel %vm46, %v738, %v744
  %v746 = vmul.f32 %v745, %v677
  %748 = vrot.lane.b32.xlu0 %v745, 64
  %v749 = vpop.permute.xlu0 %748
  %v751 = vmul.f32 %v745, %v749
  %753 = vrot.lane.b32.xlu0 %v751, 32
  %v754 = vpop.permute.xlu0 %753
  %v756 = vadd.f32 %v746, %v754
  %v757 = vtanh.pop %v756
  %759 = vrot.lane.b32.xlu0 %v757, 64
  %v760 = vpop.permute.xlu0 %759
  %v762 = vmul.f32 %v745, %v760
  %764 = vrot.lane.b32.xlu0 %v762, 32
  %v765 = vpop.permute.xlu0 %764
  %767 = vst.msk [vmem:[#allocation4 + $0xc] sm:$0x3] %vm276, %v765
  %v768 = vld [vmem:[#allocation3 + $0x4] sm:$0x3]
  %v769 = vpack.c.bf16 %v762, %v762
  %771 = vrot.lane.b32.xlu0 %v769, 32
  %v772 = vpop.permute.xlu0 %771
  %v774 = vsel %vm202, %v772, 0
  %776 = vmatprep.subr.bf16.mxu0 0
  %777 = vmatpush1.bf16.msra.mxu0 0
  %778 = vmatprep.subr.bf16.mxu0 0
  %779 = vmatpush1.bf16.msra.mxu0 0
  %780 = vmatprep.subr.bf16.mxu0 0
  %781 = vmatpush1.bf16.msra.mxu0 0
  %782 = vmatprep.subr.bf16.mxu0 0
  %783 = vmatpush1.bf16.msra.mxu0 0
  %784 = vmatprep.subr.bf16.mxu0 0
  %785 = vmatpush1.bf16.msra.mxu0 0
  %786 = vmatprep.subr.bf16.mxu0 0
  %787 = vmatpush1.bf16.msra.mxu0 0
  %788 = vmatprep.subr.bf16.mxu0 0
  %789 = vmatpush1.bf16.msra.mxu0 %v612
  %790 = vmatprep.subr.bf16.mxu0 0
  %791 = vmatpush1.bf16.msra.mxu0 %v611
  %792 = vmatprep.subr.bf16.mxu0 0
  %793 = vmatpush2.bf16.msra.mxu0 0
  %794 = vmatprep.subr.bf16.mxu0 0
  %795 = vmatpush2.bf16.msra.mxu0 0
  %796 = vmatprep.subr.bf16.mxu0 0
  %797 = vmatpush2.bf16.msra.mxu0 0
  %798 = vmatprep.subr.bf16.mxu0 0
  %799 = vmatpush2.bf16.msra.mxu0 0
  %800 = vmatprep.subr.bf16.mxu0 0
  %801 = vmatpush2.bf16.msra.mxu0 0
  %802 = vmatprep.subr.bf16.mxu0 0
  %803 = vmatpush2.bf16.msra.mxu0 0
  %804 = vmatprep.subr.bf16.mxu0 0
  %805 = vmatpush2.bf16.msra.mxu0 0
  %806 = vmatprep.subr.bf16.mxu0 0
  %807 = vmatpush2.bf16.msra.mxu0 0
  %808 = vmatprep.mubr.bf16.mxu0 0
  %809 = vmatmul.mubr.bf16.gmra.mxu0 %v774
  %v810 = vpop.f32.mrf.mxu0
  %v811 = vadd.f32 0.0, %v810
  %v812 = vpop.f32.mrf.mxu0
  %v813 = vpop.f32.mrf.mxu0
  %v814 = vpop.f32.mrf.mxu0
  %815 = vdwg.mxu0
  %v816 = vadd.f32 %v768, %v811
  %v817 = vtanh.pop %v816
  %v818 = vxor.u32 %v816, 2147483648
  %v819 = vmul.f32 %v818, 1.442695
  %v820 = vpow.pop %v819
  %v821 = vadd.f32 %v820, 1.0
  %v822 = vrcp.pop %v821
  %v823 = vmul.f32 1.0, %v822
  %v824 = vsel %vm46, %v817, %v823
  %v825 = vmul.f32 %v824, %v756
  %827 = vrot.lane.b32.xlu0 %v824, 64
  %v828 = vpop.permute.xlu0 %827
  %v830 = vmul.f32 %v824, %v828
  %832 = vrot.lane.b32.xlu0 %v830, 32
  %v833 = vpop.permute.xlu0 %832
  %v835 = vadd.f32 %v825, %v833
  %v836 = vtanh.pop %v835
  %838 = vrot.lane.b32.xlu0 %v836, 64
  %v839 = vpop.permute.xlu0 %838
  %v841 = vmul.f32 %v824, %v839
  %843 = vrot.lane.b32.xlu0 %v841, 32
  %v844 = vpop.permute.xlu0 %843
  %846 = vst.msk [vmem:[#allocation4 + $0xe] sm:$0x3] %vm276, %v844
  %v847 = vld [vmem:[#allocation4] sm:$0xff]
  %v848 = vld [vmem:[#allocation4 + $0x8] sm:$0x3]
  %v849 = vpack.c.bf16 %v848, %v847
  %v850 = vld [vmem:[#allocation4 + $0xa] sm:$0x3f]
  %v851 = vpack.c.bf16 %v850, %v850
  %v852 = vld [vmem:[%s5] sm:$0xf]
  %v853 = vld [vmem:[%s5 + $0x4] sm:$0xf]
  %v854 = vld [vmem:[%s5 + $0x8] sm:$0xf]
  %v855 = vld [vmem:[%s5 + $0xc] sm:$0xf]
  %v856 = vld [vmem:[%s6] sm:$0x1]
  %v858 = vlaneseq
  %v859 = vshrl.u32 %v858, 7
  %v860 = vsub.s32 0, %v859
  %v861 = vrot.slane %v856, %v860
  %v867 = vunpack.c.l.b16 %v852
  %v868 = vunpack.c.l.b16 %v853
  %v869 = vunpack.c.l.b16 %v854
  %v870 = vunpack.c.l.b16 %v855
  %v871 = vpack.c.b16 %v868, %v867
  %v872 = vpack.c.b16 %v870, %v869
  %v876 = vsel %vm202, %v849, 0
  %878 = vmatprep.subr.bf16.mxu0 0
  %879 = vmatpush1.bf16.msra.mxu0 0
  %880 = vmatprep.subr.bf16.mxu0 0
  %881 = vmatpush1.bf16.msra.mxu0 0
  %882 = vmatprep.subr.bf16.mxu0 0
  %883 = vmatpush1.bf16.msra.mxu0 0
  %884 = vmatprep.subr.bf16.mxu0 0
  %885 = vmatpush1.bf16.msra.mxu0 0
  %886 = vmatprep.subr.bf16.mxu0 0
  %887 = vmatpush1.bf16.msra.mxu0 0
  %888 = vmatprep.subr.bf16.mxu0 0
  %889 = vmatpush1.bf16.msra.mxu0 0
  %890 = vmatprep.subr.bf16.mxu0 0
  %891 = vmatpush1.bf16.msra.mxu0 %v872
  %892 = vmatprep.subr.bf16.mxu0 0
  %893 = vmatpush1.bf16.msra.mxu0 %v871
  %894 = vmatprep.subr.bf16.mxu0 0
  %895 = vmatpush2.bf16.msra.mxu0 0
  %896 = vmatprep.subr.bf16.mxu0 0
  %897 = vmatpush2.bf16.msra.mxu0 0
  %898 = vmatprep.subr.bf16.mxu0 0
  %899 = vmatpush2.bf16.msra.mxu0 0
  %900 = vmatprep.subr.bf16.mxu0 0
  %901 = vmatpush2.bf16.msra.mxu0 0
  %902 = vmatprep.subr.bf16.mxu0 0
  %903 = vmatpush2.bf16.msra.mxu0 0
  %904 = vmatprep.subr.bf16.mxu0 0
  %905 = vmatpush2.bf16.msra.mxu0 0
  %906 = vmatprep.subr.bf16.mxu0 0
  %907 = vmatpush2.bf16.msra.mxu0 0
  %908 = vmatprep.subr.bf16.mxu0 0
  %909 = vmatpush2.bf16.msra.mxu0 0
  %910 = vmatprep.mubr.bf16.mxu0 0
  %911 = vmatmul.mubr.bf16.gmra.mxu0 %v876
  %v912 = vpop.f32.mrf.mxu0
  %v913 = vadd.f32 %v861, %v912
  %v914 = vpop.f32.mrf.mxu0
  %v915 = vpop.f32.mrf.mxu0
  %v916 = vadd.f32 %v861, %v915
  %v917 = vpop.f32.mrf.mxu0
  %918 = vdwg.mxu0
  %v919 = vld [vmem:[%s10] sm:$0xf]
  %v920 = vld [vmem:[%s10 + $0x4] sm:$0xf]
  %v921 = vld [vmem:[%s10 + $0x8] sm:$0xf]
  %v922 = vld [vmem:[%s10 + $0xc] sm:$0xf]
  %v923 = vld [vmem:[%s11] sm:$0x1]
  %v925 = vlaneseq
  %v926 = vshrl.u32 %v925, 7
  %v927 = vsub.s32 0, %v926
  %v928 = vrot.slane %v923, %v927
  %v934 = vunpack.c.l.b16 %v919
  %v935 = vunpack.c.l.b16 %v920
  %v936 = vunpack.c.l.b16 %v921
  %v937 = vunpack.c.l.b16 %v922
  %v938 = vpack.c.b16 %v935, %v934
  %v939 = vpack.c.b16 %v937, %v936
  %v943 = vsel %vm202, %v851, 0
  %945 = vmatprep.subr.bf16.mxu0 0
  %946 = vmatpush1.bf16.msra.mxu0 0
  %947 = vmatprep.subr.bf16.mxu0 0
  %948 = vmatpush1.bf16.msra.mxu0 0
  %949 = vmatprep.subr.bf16.mxu0 0
  %950 = vmatpush1.bf16.msra.mxu0 0
  %951 = vmatprep.subr.bf16.mxu0 0
  %952 = vmatpush1.bf16.msra.mxu0 0
  %953 = vmatprep.subr.bf16.mxu0 0
  %954 = vmatpush1.bf16.msra.mxu0 0
  %955 = vmatprep.subr.bf16.mxu0 0
  %956 = vmatpush1.bf16.msra.mxu0 0
  %957 = vmatprep.subr.bf16.mxu0 0
  %958 = vmatpush1.bf16.msra.mxu0 %v939
  %959 = vmatprep.subr.bf16.mxu0 0
  %960 = vmatpush1.bf16.msra.mxu0 %v938
  %961 = vmatprep.subr.bf16.mxu0 0
  %962 = vmatpush2.bf16.msra.mxu0 0
  %963 = vmatprep.subr.bf16.mxu0 0
  %964 = vmatpush2.bf16.msra.mxu0 0
  %965 = vmatprep.subr.bf16.mxu0 0
  %966 = vmatpush2.bf16.msra.mxu0 0
  %967 = vmatprep.subr.bf16.mxu0 0
  %968 = vmatpush2.bf16.msra.mxu0 0
  %969 = vmatprep.subr.bf16.mxu0 0
  %970 = vmatpush2.bf16.msra.mxu0 0
  %971 = vmatprep.subr.bf16.mxu0 0
  %972 = vmatpush2.bf16.msra.mxu0 0
  %973 = vmatprep.subr.bf16.mxu0 0
  %974 = vmatpush2.bf16.msra.mxu0 0
  %975 = vmatprep.subr.bf16.mxu0 0
  %976 = vmatpush2.bf16.msra.mxu0 0
  %977 = vmatprep.mubr.bf16.mxu0 0
  %978 = vmatmul.mubr.bf16.gmra.mxu0 %v943
  %v979 = vpop.f32.mrf.mxu0
  %v980 = vadd.f32 %v928, %v979
  %v981 = vpop.f32.mrf.mxu0
  %v982 = vpop.f32.mrf.mxu0
  %v983 = vpop.f32.mrf.mxu0
  %984 = vdwg.mxu0
  %v985 = vmax.f32 %v913, 0.0
  %v986 = vmax.f32 %v916, 0.0
  %v987 = vmul.f32 %v985, -1.0
  %v988 = vmul.f32 %v986, -1.0
  %vm989 = vcmask 31744
  %990 = vst.msk [vmem:[%s12] sm:$0xff] %vm989, %v987
  %vm991 = vcmask 25600
  %992 = vst.msk [vmem:[%s12 + $0x8] sm:$0x3] %vm991, %v988
  %v993 = vmax.f32 %v980, 0.0
  %v994 = vmul.f32 %v993, -1.0
  %vm995 = vcmask 29696
  %996 = vst.msk [vmem:[%s12 + $0xa] sm:$0x3f] %vm995, %v994
  // Predicated region
  $region50: #{solnn_forward.1} parent=0 // pred_check
    _
  $region51: #{solnn_forward.1} parent=0 // pred_check_branch
    %998 = sbr.rel (0) target = $region53
  $region52: #{solnn_forward.1} parent=0 // pred_region
    _
  $region53: #{solnn_forward.1} parent=0 // pred_fallthru
    _
  // Predicated region
  $region54: #{solnn_forward.1} parent=0 // pred_check
    _
  $region55: #{solnn_forward.1} parent=0 // pred_check_branch
    %1000 = sbr.rel (0) target = $region57
  $region56: #{solnn_forward.1} parent=0 // pred_region
    _
  $region57: #{solnn_forward.1} parent=0 // pred_fallthru
    _

</llo_original>
